<compile_context>
chip_gen: v5e
topology: v5e:2x2
jax: 0.10.0
libtpu: 0.0.40
codegen_flags: <defaults>
</compile_context>

<pallas_src>
import jax
import jax.numpy as jnp
from jax.experimental import pallas as pl
from jax.experimental.pallas import tpu as pltpu

_MiB = 1024 * 1024


def _hardswish_kernel(x_ref, o_ref):
    x = x_ref[...]
    # Compute in f32 for sub-32-bit float inputs (precision + v5e VPU has no
    # bf16 ALUs); the kernel is HBM-bound so the casts are free.
    compute_dtype = jnp.float32 if jnp.dtype(x.dtype).itemsize < 4 else x.dtype
    xf = x.astype(compute_dtype)
    y = xf * jnp.clip(xf + 3.0, 0.0, 6.0) * (1.0 / 6.0)
    o_ref[...] = y.astype(o_ref.dtype)


def _cdiv(a: int, b: int) -> int:
    return -(-a // b)


def _round_up(v: int, m: int) -> int:
    return ((v + m - 1) // m) * m


def _tpu_budget():
    """(target_tile_bytes, vmem_limit_bytes), clamped to the chip's VMEM."""
    try:
        vmem_cap = int(pltpu.get_tpu_info().vmem_capacity_bytes)
    except Exception:
        vmem_cap = 64 * _MiB  # conservative (v7x-sized) fallback
    # 2 MiB tiles already sit at ~85% of HBM roofline; bigger buys <1% and
    # hurts v7x step count / VMEM.  Cap the limit well below physical VMEM.
    target_tile = min(2 * _MiB, vmem_cap // 16)
    vmem_limit = int(min(vmem_cap // 2, 32 * _MiB))
    return target_tile, vmem_limit


def _min_grid_steps(total_bytes: int) -> int:
    if total_bytes >= 8 * _MiB:
        return 4   # >= 2 blocks per TensorCore on v7x megacore -> per-core pipelining
    if total_bytes >= 1 * _MiB:
        return 2
    return 1


def _hardswish_2d(x2d, *, row_unit, target_tile_bytes, vmem_limit):
    """Aligned fast path: lane-dense (rows, width) slab, row-tiled grid."""
    rows, width = x2d.shape
    itemsize = jnp.dtype(x2d.dtype).itemsize
    row_bytes = width * itemsize

    tr = max(1, target_tile_bytes // row_bytes)
    if tr >= rows:
        tr = rows                                        # full-extent block (always legal)
    else:
        tr = max(row_unit, (tr // row_unit) * row_unit)  # sublane-aligned

    # Guarantee enough grid steps for megacore sharding + per-core pipelining.
    total_bytes = rows * row_bytes
    steps = _min_grid_steps(total_bytes)
    if steps > 1 and _cdiv(rows, tr) < steps:
        tr_split = _round_up(_cdiv(rows, steps), row_unit)
        tr = max(row_unit, min(tr, tr_split))
    if tr > rows:
        tr = rows

    grid = (_cdiv(rows, tr),)

    return pl.pallas_call(
        _hardswish_kernel,
        out_shape=jax.ShapeDtypeStruct((rows, width), x2d.dtype),
        grid_spec=pltpu.PrefetchScalarGridSpec(
            num_scalar_prefetch=0,
            grid=grid,
            in_specs=[pl.BlockSpec((tr, width), lambda i: (i, 0))],
            out_specs=pl.BlockSpec((tr, width), lambda i: (i, 0)),
        ),
        compiler_params=pltpu.CompilerParams(
            dimension_semantics=("parallel",),
            vmem_limit_bytes=vmem_limit,
        ),
    )(x2d)


def _hardswish_ragged(x_flat, *, vmem_limit):
    """Single-pass path for element counts with no 128-divisor.

    Zero-copy (1, n) view, lane blocks of a multiple of 128, cdiv grid with the
    partial last block masked by Pallas.  1 HBM read + 1 HBM write (vs. the old
    pad + kernel + slice = 3x traffic)."""
    n = x_flat.size
    itemsize = jnp.dtype(x_flat.dtype).itemsize
    # ~512 KiB of payload per block (modest: this layout may pad sublanes in VMEM).
    bl = max(128, ((512 * 1024) // itemsize) // 128 * 128)
    if bl >= n:
        bl = n            # single full-extent block (legal for any n)
    grid = (_cdiv(n, bl),)

    x2d = x_flat.reshape(1, n)
    out = pl.pallas_call(
        _hardswish_kernel,
        out_shape=jax.ShapeDtypeStruct((1, n), x_flat.dtype),
        grid_spec=pltpu.PrefetchScalarGridSpec(
            num_scalar_prefetch=0,
            grid=grid,
            in_specs=[pl.BlockSpec((1, bl), lambda i: (0, i))],
            out_specs=pl.BlockSpec((1, bl), lambda i: (0, i)),
        ),
        compiler_params=pltpu.CompilerParams(
            dimension_semantics=("parallel",),
            vmem_limit_bytes=vmem_limit,
        ),
    )(x2d)
    return out.reshape(-1)


def hardswish(x: jax.Array) -> jax.Array:
    """Elementwise hardswish matching torch.nn.functional.hardswish."""
    orig_shape = x.shape
    dtype = x.dtype
    if not jnp.issubdtype(dtype, jnp.floating):
        raise TypeError(f"hardswish expects a floating dtype, got {dtype}")
    n = x.size
    if n == 0:
        return x

    itemsize = jnp.dtype(dtype).itemsize
    # dtype-aware sublane alignment: 8 (f32), 16 (bf16/f16), 32 (8-bit floats)
    row_unit = max(8, 32 // itemsize)
    target_tile_bytes, vmem_limit = _tpu_budget()

    x_flat = x.reshape(-1)

    # ---- choose a wide, lane-dense, zero-copy 2-D view when possible ----
    lane_candidates = (2048, 1024, 512, 256, 128)
    width = None
    for w in lane_candidates:                 # prefer widths giving >= row_unit rows
        if n % w == 0 and n // w >= row_unit:
            width = w
            break
    if width is None:
        for w in reversed(lane_candidates):   # small inputs: prefer 128 -> maximize rows
            if n % w == 0:
                width = w
                break

    if width is not None:
        out2d = _hardswish_2d(
            x_flat.reshape(n // width, width),
            row_unit=row_unit,
            target_tile_bytes=target_tile_bytes,
            vmem_limit=vmem_limit,
        )
        return out2d.reshape(orig_shape)

    # n has no 128-divisor: single-pass ragged path (no pad, no slice).
    out_flat = _hardswish_ragged(x_flat, vmem_limit=vmem_limit)
    return out_flat.reshape(orig_shape)


def hardswish_ref(x):
    # Pure-JAX reference matching torch.nn.functional.hardswish
    xf = x.astype(jnp.float32)
    return (xf * jnp.clip(xf + 3.0, 0.0, 6.0) / 6.0).astype(x.dtype)


if __name__ == "__main__":
    key = jax.random.PRNGKey(0)

    # NCHW input, consistent with a MobileNetV3 conv activation.
    x = jax.random.normal(key, (2, 4, 16, 16), dtype=jnp.float32) * 4.0
    y = jax.block_until_ready(hardswish(x))
    y_ref = hardswish_ref(x)
    assert y.shape == x.shape and y.dtype == x.dtype
    assert jnp.allclose(y, y_ref, atol=1e-6, rtol=1e-6), "f32 mismatch vs reference"

    # Non-128-multiple size -> exercises the single-pass ragged (1, n) path.
    k2 = jax.random.PRNGKey(0)
    x_odd = jax.random.normal(k2, (3, 5, 7, 11), dtype=jnp.float32) * 4.0
    y_odd = jax.block_until_ready(hardswish(x_odd))
    assert y_odd.shape == x_odd.shape
    assert jnp.allclose(y_odd, hardswish_ref(x_odd), atol=1e-6, rtol=1e-6), "odd-size mismatch"

    # bf16 path (dtype-aware alignment + in-kernel f32 op-math).
    x_bf16 = (jax.random.normal(key, (2, 4, 16, 16), dtype=jnp.float32) * 4.0).astype(jnp.bfloat16)
    y_bf16 = jax.block_until_ready(hardswish(x_bf16))
    assert y_bf16.dtype == jnp.bfloat16
    assert jnp.allclose(y_bf16.astype(jnp.float32),
                        hardswish_ref(x_bf16).astype(jnp.float32),
                        atol=5e-2, rtol=5e-2), "bf16 mismatch"

    # Mid-size activation -> multi-step grid with a masked partial last block.
    k3 = jax.random.PRNGKey(0)
    x_mid = jax.random.normal(k3, (25, 16, 32, 32), dtype=jnp.float32) * 4.0
    y_mid = jax.block_until_ready(hardswish(x_mid))
    assert jnp.allclose(y_mid, hardswish_ref(x_mid), atol=1e-6, rtol=1e-6), "mid-size mismatch"

    print("KERNEL_OK")
</pallas_src>

<mosaic_0001>
module attributes {stable_mosaic.version = 11 : i64} {
  func.func @_hardswish_kernel(%arg0: i32, %arg1: memref<8x256xf32, #tpu.memory_space<vmem>>, %arg2: memref<8x256xf32, #tpu.memory_space<vmem>>) attributes {dimension_semantics = [#tpu.dimension_semantics<parallel>], iteration_bounds = array<i64: 1>, scalar_prefetch = 0 : i64, scratch_operands = 0 : i64, tpu.core_type = #tpu.core_type<tc>, window_params = [{transform_indices = @transform_0, window_bounds = array<i64: 8, 256>}, {transform_indices = @transform_1, window_bounds = array<i64: 8, 256>}]} {
    %c0 = arith.constant 0 : index
    %c0_0 = arith.constant 0 : index
    %0 = vector.load %arg1[%c0, %c0_0] : memref<8x256xf32, #tpu.memory_space<vmem>>, vector<8x256xf32>
    %cst = arith.constant 3.000000e+00 : f32
    %1 = vector.broadcast %cst : f32 to vector<8x256xf32>
    %2 = arith.addf %0, %1 : vector<8x256xf32>
    %cst_1 = arith.constant 0.000000e+00 : f32
    %cst_2 = arith.constant 6.000000e+00 : f32
    %3 = vector.broadcast %cst_1 : f32 to vector<8x256xf32>
    %4 = arith.maximumf %3, %2 : vector<8x256xf32>
    %5 = vector.broadcast %cst_2 : f32 to vector<8x256xf32>
    %6 = arith.minimumf %5, %4 : vector<8x256xf32>
    %7 = arith.mulf %0, %6 : vector<8x256xf32>
    %cst_3 = arith.constant 0.166666672 : f32
    %8 = vector.broadcast %cst_3 : f32 to vector<8x256xf32>
    %9 = arith.mulf %7, %8 : vector<8x256xf32>
    %c0_4 = arith.constant 0 : index
    %c0_5 = arith.constant 0 : index
    %10 = vector.load %arg2[%c0_4, %c0_5] : memref<8x256xf32, #tpu.memory_space<vmem>>, vector<8x256xf32>
    tpu.vector_store %arg2[%c0_4, %c0_5], %9 {strides = array<i32>} : memref<8x256xf32, #tpu.memory_space<vmem>>, vector<8x256xf32>,
    return
  }
  func.func @transform_0(%arg0: i32) -> (i32, i32) {
    %c0_i32 = arith.constant 0 : i32
    %c0_i32_0 = arith.constant 0 : i32
    return %arg0, %c0_i32 : i32, i32
  }
  func.func @transform_1(%arg0: i32) -> (i32, i32) {
    %c0_i32 = arith.constant 0 : i32
    %c0_i32_0 = arith.constant 0 : i32
    return %arg0, %c0_i32 : i32, i32
  }
}

</mosaic_0001>

<llo_original>
// kernel: tpu_custom_call.1
$region0: #{tpu_custom_call.1}
  #allocation0 [shape = 'u32[]', space=smem, size = 0x4, offset = 0x4, fixed_abs, tag = 'smem constant byte address 0x4 - core index']
  #allocation1 [shape = 'u32[72,128]{1,0:T(1,128)}', space=vmem, size = 0x9000, scoped, tag = 'internal scratch']
  %s0 = inlined_call_operand.hbm [shape: f32[8,256], index: 0, kind: input, shape index: {}]
  %s1 = inlined_call_operand.hbm [shape: f32[8,256], index: 1, kind: output, shape index: {}]
  %s2 = sld [smem:[#allocation0]]
  $region18: #{tpu_custom_call.1} parent=0
    _
  %s4 = ssub.s32 1, %s2
  %s5 = scalar_select 0, %s4, %s2
  $region1: #{tpu_custom_call.1} parent=0
    #allocation2 [shape = 'u8[8192]{0}', space=vmem, size = 0x2000, scoped, tag = 'input window, operand 0, single buffered']
    #allocation3 [shape = 's32[1]{0}', space=sflag, size = 0x4, scoped, tag = 'scoped memory for tpu_custom_call.1']
    #allocation4 [shape = 's32[1]{0}', space=sflag, size = 0x4, scoped, tag = 'scoped memory for tpu_custom_call.1']
    #allocation5 [shape = 'u8[8192]{0}', space=vmem, size = 0x2000, scoped, tag = 'output window, operand 0, single buffered']
    %6 = vsyncpa [#allocation3], 0
    %7 = vsyncpa [#allocation4], 0
    // Predicated region
    $region2: #{tpu_custom_call.1} parent=1 // pred_check
      _
    $region3: #{tpu_custom_call.1} parent=1 // pred_check_branch
      %9 = sbr.rel (0) target = $region5
    $region4: #{tpu_custom_call.1} parent=1 // pred_region
      %11 = vsyncadd [#allocation3], 0
      %s13 = sshll.u32 %s0, 4
      %s14 = int_to_ptr.hbm [resolvable:$true] %s13
      %s15 = sshll.u32 [#allocation2], 4
      %s16 = int_to_ptr.vmem [resolvable:$true] %s15
      %18 = dma.hbm_to_vmem [thread:$0]  %s14, 256, %s16, [#allocation3]
    $region5: #{tpu_custom_call.1} parent=1 // pred_fallthru
      _
    // Predicated region
    $region6: #{tpu_custom_call.1} parent=1 // pred_check
      _
    $region7: #{tpu_custom_call.1} parent=1 // pred_check_branch
      %20 = sbr.rel (0) target = $region9
    $region8: #{tpu_custom_call.1} parent=1 // pred_region
      %22 = dma.done [#allocation3], 256
    $region9: #{tpu_custom_call.1} parent=1 // pred_fallthru
      _
    %v23 = vld [vmem:[#allocation2] sm:$0xff]
    %v24 = vld [vmem:[#allocation2 + $0x8] sm:$0xff]
    %v25 = vadd.f32 %v23, 3.0
    %v26 = vadd.f32 %v24, 3.0
    %v27 = vmax.f32 %v25, 0.0
    %v28 = vmax.f32 %v26, 0.0
    %v29 = vmin.f32 %v27, 6.0
    %v30 = vmin.f32 %v28, 6.0
    %v31 = vmul.f32 %v23, %v29
    %v32 = vmul.f32 %v24, %v30
    %v33 = vmul.f32 %v31, 0.16666667
    %v34 = vmul.f32 %v32, 0.16666667
    %35 = vst [vmem:[#allocation5] sm:$0xff] %v33
    %36 = vst [vmem:[#allocation5 + $0x8] sm:$0xff] %v34
    // Predicated region
    $region10: #{tpu_custom_call.1} parent=1 // pred_check
      _
    $region11: #{tpu_custom_call.1} parent=1 // pred_check_branch
      %38 = sbr.rel (0) target = $region13
    $region12: #{tpu_custom_call.1} parent=1 // pred_region
      %40 = vsyncadd [#allocation4], 0
      %s42 = sshll.u32 [#allocation5], 4
      %s43 = int_to_ptr.vmem [resolvable:$true] %s42
      %s44 = sshll.u32 %s1, 4
      %s45 = int_to_ptr.hbm [resolvable:$true] %s44
      %47 = dma.vmem_to_hbm [thread:$0]  %s43, 256, %s45, [#allocation4]
    $region13: #{tpu_custom_call.1} parent=1 // pred_fallthru
      _
    // Predicated region
    $region14: #{tpu_custom_call.1} parent=1 // pred_check
      _
    $region15: #{tpu_custom_call.1} parent=1 // pred_check_branch
      %49 = sbr.rel (0) target = $region17
    $region16: #{tpu_custom_call.1} parent=1 // pred_region
      %51 = dma.done [#allocation4], 256
    $region17: #{tpu_custom_call.1} parent=1 // pred_fallthru
      _
    %52 = vsyncpa [#allocation3], 1
    %53 = vsyncpa [#allocation4], 1

</llo_original>
